<compile_context>
chip_gen: v6e
topology: v6e:2x2x1
jax: 0.10.0
libtpu: 0.0.40
codegen_flags: <defaults>
</compile_context>

<pallas_src>
import functools

import jax
import jax.numpy as jnp
from jax import lax
from jax.experimental import pallas as pl
from jax.experimental.pallas import tpu as pltpu


def _round_up(x, m):
    return ((x + m - 1) // m) * m


def _kl_loss_kernel(pred_ref, label_ref, out_ref, *, inv_t, n_rows, n_cols,
                    tile_n, mask_rows, mask_cols):
    """One grid step: (tile_n, c_pad) rows -> one partial-sum scalar.

    Each grid step writes its own output block (no cross-step accumulation),
    so the grid axis is fully parallel.
    """
    p = pred_ref[...].astype(jnp.float32) * jnp.float32(inv_t)
    l = label_ref[...].astype(jnp.float32) * jnp.float32(inv_t)
    shape = p.shape  # (tile_n, c_pad), static

    col_mask = None
    if mask_cols:
        col_ids = lax.broadcasted_iota(jnp.int32, shape, 1)
        col_mask = col_ids < n_cols
        neg = jnp.float32(-1e30)
        # Padded classes must not participate in either softmax.
        p = jnp.where(col_mask, p, neg)
        l = jnp.where(col_mask, l, neg)

    # log_softmax(pred / T) along the class axis.
    p_max = jnp.max(p, axis=1, keepdims=True)
    p_shift = p - p_max
    log_z = jnp.log(jnp.sum(jnp.exp(p_shift), axis=1, keepdims=True))
    log_predict = p_shift - log_z

    # softmax(label / T) + 1e-7 along the class axis.
    l_max = jnp.max(l, axis=1, keepdims=True)
    exp_l = jnp.exp(l - l_max)
    sum_l = jnp.sum(exp_l, axis=1, keepdims=True)
    # One per-row reciprocal instead of a per-element divide.
    target = exp_l * (jnp.float32(1.0) / sum_l) + jnp.float32(1e-7)

    # Exact reference math: log(softmax + 1e-7).
    term = target * (jnp.log(target) - log_predict)

    # Zero out padded rows / padded classes before the block reduction.
    mask = col_mask
    if mask_rows:
        row_ids = (lax.broadcasted_iota(jnp.int32, shape, 0)
                   + pl.program_id(0) * tile_n)
        row_mask = row_ids < n_rows
        mask = row_mask if mask is None else (mask & row_mask)
    if mask is not None:
        term = jnp.where(mask, term, jnp.float32(0.0))

    out_ref[0, 0] = jnp.sum(term)


def kl_loss_pallas(pred, label, temperature):
    """Pallas TPU implementation of KLLoss.forward.

    pred, label: (N, C) arrays. Returns a float32 scalar.
    """
    assert pred.shape == label.shape and pred.ndim == 2
    n, c = pred.shape

    # Lane-dense class axis: pad C up to a multiple of 128.
    c_pad = _round_up(max(c, 128), 128)

    # Row tile: big enough to amortize the ~0.35us per-grid-step overhead,
    # small enough that 2 inputs x 2 pipeline buffers fit scoped VMEM on every
    # TPU generation (v7x has only 64 MiB physical VMEM per core).
    per_tile_budget_bytes = 4 * 1024 * 1024            # per input, per buffer
    bytes_per_row = c_pad * 4                          # f32 compute
    max_rows = max(8, (per_tile_budget_bytes // bytes_per_row) // 8 * 8)
    tile_n = int(min(1024, max_rows, _round_up(n, 8)))
    tile_n = max(8, (tile_n // 8) * 8)

    n_pad = _round_up(n, tile_n)
    grid_n = n_pad // tile_n

    if (n_pad != n) or (c_pad != c):
        pad = ((0, n_pad - n), (0, c_pad - c))
        pred_p = jnp.pad(pred, pad)
        label_p = jnp.pad(label, pad)
    else:
        pred_p, label_p = pred, label

    kernel = functools.partial(
        _kl_loss_kernel,
        inv_t=1.0 / float(temperature),
        n_rows=n,
        n_cols=c,
        tile_n=tile_n,
        mask_rows=(n_pad != n),
        mask_cols=(c_pad != c),
    )

    partials = pl.pallas_call(
        kernel,
        out_shape=jax.ShapeDtypeStruct((grid_n, 1), jnp.float32),
        grid_spec=pltpu.PrefetchScalarGridSpec(
            num_scalar_prefetch=0,
            grid=(grid_n,),
            in_specs=[
                pl.BlockSpec((tile_n, c_pad), lambda i: (i, 0)),
                pl.BlockSpec((tile_n, c_pad), lambda i: (i, 0)),
            ],
            out_specs=pl.BlockSpec((1, 1), lambda i: (i, 0),
                                   memory_space=pltpu.SMEM),
        ),
        compiler_params=pltpu.CompilerParams(
            # Independent per-block partial sums -> parallel (megacore on v7x).
            dimension_semantics=("parallel",),
            # Safe on v5e/v6e (128 MiB physical) and v7x (64 MiB physical);
            # lifts v5e's 16 MiB scoped-VMEM default.
            vmem_limit_bytes=48 * 1024 * 1024,
        ),
    )(pred_p, label_p)

    # T^2 / N scaling applied once, outside the per-block hot path.
    t = jnp.float32(temperature)
    total = jnp.sum(partials)
    return t * t * (total / jnp.float32(n))


def kl_loss_reference(pred, label, temperature):
    """Pure-JAX reference for verification."""
    t = jnp.float32(temperature)
    log_predict = jax.nn.log_softmax(pred.astype(jnp.float32) / t, axis=1)
    target = jax.nn.softmax(label.astype(jnp.float32) / t, axis=1) + 1e-7
    n = pred.shape[0]
    return t * t * jnp.sum(
        jnp.sum(target * (jnp.log(target) - log_predict), axis=1)) / n


if __name__ == "__main__":
    key = jax.random.PRNGKey(0)
    k1, k2, k3, k4 = jax.random.split(key, 4)
    temperature = 4.0

    # Small aligned-row case; C=32 < 128 exercises class-axis padding/masking.
    pred = jax.random.normal(k1, (8, 32), dtype=jnp.float32)
    label = jax.random.normal(k2, (8, 32), dtype=jnp.float32)
    loss = jax.block_until_ready(kl_loss_pallas(pred, label, temperature))
    ref = kl_loss_reference(pred, label, temperature)
    assert jnp.allclose(loss, ref, rtol=1e-5, atol=1e-6), (loss, ref)

    # Ragged case: both row padding and column padding are masked in-kernel.
    pred2 = jax.random.normal(k3, (10, 200), dtype=jnp.float32)
    label2 = jax.random.normal(k4, (10, 200), dtype=jnp.float32)
    loss2 = jax.block_until_ready(kl_loss_pallas(pred2, label2, temperature))
    ref2 = kl_loss_reference(pred2, label2, temperature)
    assert jnp.allclose(loss2, ref2, rtol=1e-5, atol=1e-6), (loss2, ref2)

    print("KERNEL_OK")
</pallas_src>

<mosaic_0001>
module attributes {stable_mosaic.version = 11 : i64} {
  func.func @_kl_loss_kernel(%arg0: i32, %arg1: memref<8x128xf32, #tpu.memory_space<vmem>>, %arg2: memref<8x128xf32, #tpu.memory_space<vmem>>, %arg3: memref<1x1xf32, #tpu.memory_space<smem>>) attributes {dimension_semantics = [#tpu.dimension_semantics<parallel>], iteration_bounds = array<i64: 1>, scalar_prefetch = 0 : i64, scratch_operands = 0 : i64, tpu.core_type = #tpu.core_type<tc>, window_params = [{transform_indices = @transform_0, window_bounds = array<i64: 8, 128>}, {transform_indices = @transform_1, window_bounds = array<i64: 8, 128>}, {transform_indices = @transform_2, window_bounds = array<i64: 1, 1>}]} {
    %c0 = arith.constant 0 : index
    %c0_0 = arith.constant 0 : index
    %0 = vector.load %arg1[%c0, %c0_0] : memref<8x128xf32, #tpu.memory_space<vmem>>, vector<8x128xf32>
    %cst = arith.constant 2.500000e-01 : f32
    %1 = vector.broadcast %cst : f32 to vector<8x128xf32>
    %2 = arith.mulf %0, %1 : vector<8x128xf32>
    %c0_1 = arith.constant 0 : index
    %c0_2 = arith.constant 0 : index
    %3 = vector.load %arg2[%c0_1, %c0_2] : memref<8x128xf32, #tpu.memory_space<vmem>>, vector<8x128xf32>
    %cst_3 = arith.constant 2.500000e-01 : f32
    %4 = vector.broadcast %cst_3 : f32 to vector<8x128xf32>
    %5 = arith.mulf %3, %4 : vector<8x128xf32>
    %6 = tpu.iota {dimensions = array<i32: 1>} : vector<8x128xi32>
    %c32_i32 = arith.constant 32 : i32
    %7 = vector.broadcast %c32_i32 : i32 to vector<8x128xi32>
    %8 = arith.cmpi slt, %6, %7 : vector<8x128xi32>
    %cst_4 = arith.constant -1.000000e+30 : f32
    %9 = vector.broadcast %cst_4 : f32 to vector<8x128xf32>
    %10 = arith.select %8, %2, %9 : vector<8x128xi1>, vector<8x128xf32>
    %cst_5 = arith.constant -1.000000e+30 : f32
    %11 = vector.broadcast %cst_5 : f32 to vector<8x128xf32>
    %12 = arith.select %8, %5, %11 : vector<8x128xi1>, vector<8x128xf32>
    %cst_6 = arith.constant dense<0xFF800000> : vector<8xf32>
    %13 = vector.multi_reduction <maximumf>, %10, %cst_6 [1] : vector<8x128xf32> to vector<8xf32>
    %14 = vector.shape_cast %13 : vector<8xf32> to vector<8x1xf32>
    %15 = vector.broadcast %14 : vector<8x1xf32> to vector<8x128xf32>
    %16 = arith.subf %10, %15 : vector<8x128xf32>
    %17 = math.exp %16 : vector<8x128xf32>
    %cst_7 = arith.constant dense<0.000000e+00> : vector<8xf32>
    %18 = vector.multi_reduction <add>, %17, %cst_7 [1] : vector<8x128xf32> to vector<8xf32>
    %19 = vector.shape_cast %18 : vector<8xf32> to vector<8x1xf32>
    %20 = math.log %19 : vector<8x1xf32>
    %21 = vector.broadcast %20 : vector<8x1xf32> to vector<8x128xf32>
    %22 = arith.subf %16, %21 : vector<8x128xf32>
    %cst_8 = arith.constant dense<0xFF800000> : vector<8xf32>
    %23 = vector.multi_reduction <maximumf>, %12, %cst_8 [1] : vector<8x128xf32> to vector<8xf32>
    %24 = vector.shape_cast %23 : vector<8xf32> to vector<8x1xf32>
    %25 = vector.broadcast %24 : vector<8x1xf32> to vector<8x128xf32>
    %26 = arith.subf %12, %25 : vector<8x128xf32>
    %27 = math.exp %26 : vector<8x128xf32>
    %cst_9 = arith.constant dense<0.000000e+00> : vector<8xf32>
    %28 = vector.multi_reduction <add>, %27, %cst_9 [1] : vector<8x128xf32> to vector<8xf32>
    %29 = vector.shape_cast %28 : vector<8xf32> to vector<8x1xf32>
    %cst_10 = arith.constant 1.000000e+00 : f32
    %30 = vector.broadcast %cst_10 : f32 to vector<8x1xf32>
    %31 = arith.divf %30, %29 : vector<8x1xf32>
    %32 = vector.broadcast %31 : vector<8x1xf32> to vector<8x128xf32>
    %33 = arith.mulf %27, %32 : vector<8x128xf32>
    %cst_11 = arith.constant 1.000000e-07 : f32
    %34 = vector.broadcast %cst_11 : f32 to vector<8x128xf32>
    %35 = arith.addf %33, %34 : vector<8x128xf32>
    %36 = math.log %35 : vector<8x128xf32>
    %37 = arith.subf %36, %22 : vector<8x128xf32>
    %38 = arith.mulf %35, %37 : vector<8x128xf32>
    %cst_12 = arith.constant 0.000000e+00 : f32
    %39 = vector.broadcast %cst_12 : f32 to vector<8x128xf32>
    %40 = arith.select %8, %38, %39 : vector<8x128xi1>, vector<8x128xf32>
    %41 = vector.shape_cast %40 : vector<8x128xf32> to vector<1x8x128xf32>
    %cst_13 = arith.constant dense<0.000000e+00> : vector<1xf32>
    %42 = vector.multi_reduction <add>, %41, %cst_13 [1, 2] : vector<1x8x128xf32> to vector<1xf32>
    %43 = vector.shape_cast %42 : vector<1xf32> to vector<1x1x1xf32>
    %44 = vector.extract %43[0, 0, 0] : f32 from vector<1x1x1xf32>
    %c0_14 = arith.constant 0 : index
    %c0_15 = arith.constant 0 : index
    %45 = memref.load %arg3[%c0_14, %c0_15] : memref<1x1xf32, #tpu.memory_space<smem>>
    memref.store %44, %arg3[%c0_14, %c0_15] : memref<1x1xf32, #tpu.memory_space<smem>>
    return
  }
  func.func @transform_0(%arg0: i32) -> (i32, i32) {
    %c0_i32 = arith.constant 0 : i32
    %c0_i32_0 = arith.constant 0 : i32
    return %arg0, %c0_i32 : i32, i32
  }
  func.func @transform_1(%arg0: i32) -> (i32, i32) {
    %c0_i32 = arith.constant 0 : i32
    %c0_i32_0 = arith.constant 0 : i32
    return %arg0, %c0_i32 : i32, i32
  }
  func.func @transform_2(%arg0: i32) -> (i32, i32) {
    %c0_i32 = arith.constant 0 : i32
    %c0_i32_0 = arith.constant 0 : i32
    return %arg0, %c0_i32 : i32, i32
  }
}

</mosaic_0001>

<llo_original>
// kernel: tpu_custom_call.1
$region0: #{tpu_custom_call.1}
  #allocation0 [shape = 'u32[]', space=smem, size = 0x4, offset = 0x4, fixed_abs, tag = 'smem constant byte address 0x4 - core index']
  #allocation1 [shape = 'u32[144,128]{1,0:T(1,128)}', space=vmem, size = 0x12000, scoped, tag = 'internal scratch']
  %s0 = inlined_call_operand.hbm [shape: f32[8,128], index: 0, kind: input, shape index: {}]
  %s1 = inlined_call_operand.hbm [shape: f32[8,128], index: 1, kind: input, shape index: {}]
  %s2 = inlined_call_operand.hbm [shape: f32[1,1], index: 2, kind: output, shape index: {}]
  %s3 = sld [smem:[#allocation0]]
  $region26: #{tpu_custom_call.1} parent=0
    _
  %s5 = ssub.s32 1, %s3
  %s6 = scalar_select 0, %s5, %s3
  $region1: #{tpu_custom_call.1} parent=0
    #allocation2 [shape = 'u8[4096]{0}', space=vmem, size = 0x1000, scoped, tag = 'input window, operand 0, single buffered']
    #allocation3 [shape = 's32[1]{0}', space=sflag, size = 0x4, scoped, tag = 'scoped memory for tpu_custom_call.1']
    #allocation4 [shape = 's32[1]{0}', space=sflag, size = 0x4, scoped, tag = 'scoped memory for tpu_custom_call.1']
    #allocation5 [shape = 'u8[4096]{0}', space=vmem, size = 0x1000, scoped, tag = 'input window, operand 1, single buffered']
    #allocation6 [shape = 's32[1]{0}', space=sflag, size = 0x4, scoped, tag = 'scoped memory for tpu_custom_call.1']
    #allocation7 [shape = 'u8[512]{0}', space=smem, size = 0x200, scoped, tag = 'output window, operand 0, single buffered']
    %7 = vsyncpa [#allocation3], 0
    %8 = vsyncpa [#allocation6], 0
    %9 = vsyncpa [#allocation4], 0
    // Predicated region
    $region2: #{tpu_custom_call.1} parent=1 // pred_check
      _
    $region3: #{tpu_custom_call.1} parent=1 // pred_check_branch
      %11 = sbr.rel (0) target = $region5
    $region4: #{tpu_custom_call.1} parent=1 // pred_region
      %s13 = ssub.s32 128, 128
      %14 = vsyncadd [#allocation3], %s13
      %s16 = sshll.u32 [#allocation2], 4
      %s17 = int_to_ptr.vmem [resolvable:$true] %s16
      %19 = dma.hbm_to_vmem [thread:$0]  %s0, 128, %s17, [#allocation3]
    $region5: #{tpu_custom_call.1} parent=1 // pred_fallthru
      _
    // Predicated region
    $region6: #{tpu_custom_call.1} parent=1 // pred_check
      _
    $region7: #{tpu_custom_call.1} parent=1 // pred_check_branch
      %21 = sbr.rel (0) target = $region9
    $region8: #{tpu_custom_call.1} parent=1 // pred_region
      %s23 = ssub.s32 128, 128
      %24 = vsyncadd [#allocation6], %s23
      %s26 = sshll.u32 [#allocation5], 4
      %s27 = int_to_ptr.vmem [resolvable:$true] %s26
      %29 = dma.hbm_to_vmem [thread:$0]  %s1, 128, %s27, [#allocation6]
    $region9: #{tpu_custom_call.1} parent=1 // pred_fallthru
      _
    // Predicated region
    $region10: #{tpu_custom_call.1} parent=1 // pred_check
      _
    $region11: #{tpu_custom_call.1} parent=1 // pred_check_branch
      %31 = sbr.rel (0) target = $region13
    $region12: #{tpu_custom_call.1} parent=1 // pred_region
      %32 = dma.done [#allocation3], 128
    $region13: #{tpu_custom_call.1} parent=1 // pred_fallthru
      _
    // Predicated region
    $region14: #{tpu_custom_call.1} parent=1 // pred_check
      _
    $region15: #{tpu_custom_call.1} parent=1 // pred_check_branch
      %34 = sbr.rel (0) target = $region17
    $region16: #{tpu_custom_call.1} parent=1 // pred_region
      %35 = dma.done [#allocation6], 128
    $region17: #{tpu_custom_call.1} parent=1 // pred_fallthru
      _
    %v36 = vld [vmem:[#allocation2] sm:$0xff]
    %v37 = vmul.f32 %v36, 0.25
    %v38 = vld [vmem:[#allocation5] sm:$0xff]
    %v39 = vmul.f32 %v38, 0.25
    %v40 = vlaneseq
    %v41 = vand.u32 %v40, 127
    %vm42 = vcmp.lt.s32.totalorder %v41, 32
    %v43 = vsel %vm42, %v37, -1e+30
    %v44 = vsel %vm42, %v39, -1e+30
    %45 = vmax.xlane.f32.xlu0 %v43
    %v46 = vpop.xlane.xlu0 %45
    %v47 = vsub.f32 %v43, %v46
    %v48 = vmul.f32 %v47, 1.442695
    %v49 = vpow.pop %v48
    %50 = vadd.xlane.f32.xlu0 %v49
    %v51 = vpop.xlane.xlu0 %50
    %v52 = vlog2.pop %v51
    %v53 = vmul.f32 %v52, 0.6931472
    %v54 = vsub.f32 %v47, %v53
    %55 = vmax.xlane.f32.xlu0 %v44
    %v56 = vpop.xlane.xlu0 %55
    %v57 = vsub.f32 %v44, %v56
    %v58 = vmul.f32 %v57, 1.442695
    %v59 = vpow.pop %v58
    %60 = vadd.xlane.f32.xlu0 %v59
    %v61 = vpop.xlane.xlu0 %60
    %v62 = vrcp.pop %v61
    %v63 = vmul.f32 1.0, %v62
    %v64 = vmul.f32 %v59, %v63
    %v65 = vadd.f32 %v64, 1e-07
    %v66 = vlog2.pop %v65
    %v67 = vmul.f32 %v66, 0.6931472
    %v68 = vsub.f32 %v67, %v54
    %v69 = vmul.f32 %v65, %v68
    %v70 = vsel %vm42, %v69, 0.0
    %71 = vadd.xlane.f32.xlu0 %v70
    %v72 = vpop.xlane.xlu0 %71
    %v73 = vrot.slane %v72, 4
    %v74 = vadd.f32 %v72, %v73
    %v75 = vrot.slane %v74, 2
    %v76 = vadd.f32 %v74, %v75
    %v77 = vrot.slane %v76, 1
    %v78 = vadd.f32 %v76, %v77
    %s79 = vtos %v78
    %s80 = scalar_lea.smem [#allocation7], 0
    %81 = sst [smem:[%s80]] %s79
    // Predicated region
    $region18: #{tpu_custom_call.1} parent=1 // pred_check
      _
    $region19: #{tpu_custom_call.1} parent=1 // pred_check_branch
      %83 = sbr.rel (0) target = $region21
    $region20: #{tpu_custom_call.1} parent=1 // pred_region
      %s85 = ssub.s32 16, 16
      %86 = vsyncadd [#allocation4], %s85
      %89 = dma.smem_to_hbm [#allocation7], 16, %s2, [#allocation4]
    $region21: #{tpu_custom_call.1} parent=1 // pred_fallthru
      _
    // Predicated region
    $region22: #{tpu_custom_call.1} parent=1 // pred_check
      _
    $region23: #{tpu_custom_call.1} parent=1 // pred_check_branch
      %91 = sbr.rel (0) target = $region25
    $region24: #{tpu_custom_call.1} parent=1 // pred_region
      %92 = dma.done [#allocation4], 16
    $region25: #{tpu_custom_call.1} parent=1 // pred_fallthru
      _
    %93 = sfence
    %94 = vsyncpa [#allocation3], 1
    %95 = vsyncpa [#allocation6], 1
    %96 = vsyncpa [#allocation4], 1

</llo_original>
